<compile_context>
chip_gen: v7x
topology: tpu7x:2x2x1
jax: 0.10.0
libtpu: 0.0.40
codegen_flags: <defaults>
</compile_context>

<pallas_src>
import jax
import jax.numpy as jnp
from jax.experimental import pallas as pl
from jax.experimental.pallas import tpu as pltpu


def _round_up(x, m):
    return (x + m - 1) // m * m


def pack_params(params, latent_dim, action_dim, hidden):
    """Pack (w1, b1, w2, b2, w3, b3) into one (rows, hidden_padded) f32 slab.

    hidden is zero-padded up to the native 128-lane width.  Sections (each
    start row is 8-aligned so in-kernel slices stay sublane aligned):
      w1_lat (L, HP), w1_act (A, HP), b1 (1, HP), w2 (HP, HP), b2 (1, HP),
      w3 row (8, HP) [w3.T replicated 8x for an aligned trans-B matmul],
      b3 row (1, HP) [replicated across lanes].
    Returns (packed, offsets, hidden_padded).
    """
    w1, b1, w2, b2, w3, b3 = params
    hp = max(128, _round_up(hidden, 128))

    def pad_cols(a):
        a = a.astype(jnp.float32)
        return jnp.pad(a, ((0, 0), (0, hp - a.shape[1])))

    w3_row = pad_cols(w3.T)                                        # (1, HP)
    sections = [
        pad_cols(w1[:latent_dim]),                                 # (L, HP)
        pad_cols(w1[latent_dim:]),                                 # (A, HP)
        pad_cols(b1),                                              # (1, HP)
        jnp.pad(w2.astype(jnp.float32),
                ((0, hp - hidden), (0, hp - hidden))),             # (HP, HP)
        pad_cols(b2),                                              # (1, HP)
        jnp.broadcast_to(w3_row, (8, hp)),                         # (8, HP)
        jnp.broadcast_to(jnp.reshape(b3, (1, 1)).astype(jnp.float32), (1, hp)),
    ]
    offsets = []
    rows = 0
    for s in sections:
        offsets.append(rows)
        rows += _round_up(int(s.shape[0]), 8)
    packed = jnp.zeros((rows, hp), jnp.float32)
    for off, s in zip(offsets, sections):
        packed = packed.at[off:off + s.shape[0], :].set(s)
    return packed, tuple(offsets), hp


def make_qfunction_kernel(latent_dim, action_dim, hidden_padded, offsets,
                          lane_dense_out, matmul_dtype):
    o_w1l, o_w1a, o_b1, o_w2, o_b2, o_w3, o_b3 = offsets
    md = matmul_dtype

    def kernel(lat_ref, act_ref, p_ref, o_ref):
        lat = lat_ref[...].astype(md)                        # (Bt, L)
        act = act_ref[...].astype(md)                        # (Bt, A)

        # Static slices of the packed parameter slab (views, no extra DMAs).
        w1l = p_ref[o_w1l:o_w1l + latent_dim, :].astype(md)  # (L, HP)
        w1a = p_ref[o_w1a:o_w1a + action_dim, :].astype(md)  # (A, HP)
        b1 = p_ref[o_b1:o_b1 + 1, :]                         # (1, HP)
        w2 = p_ref[o_w2:o_w2 + hidden_padded, :].astype(md)  # (HP, HP)
        b2 = p_ref[o_b2:o_b2 + 1, :]                         # (1, HP)
        b3r = p_ref[o_b3:o_b3 + 1, :]                        # (1, HP), replicated

        # Layer 1: fused concat via split-W1 (lat @ W1[:L] + act @ W1[L:]).
        h = (jnp.dot(lat, w1l, preferred_element_type=jnp.float32)
             + jnp.dot(act, w1a, preferred_element_type=jnp.float32)
             + b1)
        h = jnp.maximum(h, 0.0)

        # Layer 2: Linear + ReLU (MXU).  Zero-padded lanes stay exactly 0.
        h = jnp.dot(h.astype(md), w2, preferred_element_type=jnp.float32) + b2
        h = jnp.maximum(h, 0.0)                              # (Bt, HP), f32

        if lane_dense_out:
            # Grid path: lane-dense (1, Bt) output row.  Use the 8x-replicated
            # w3 section so the trans-B matmul keeps an (8,*)-aligned LHS,
            # then take row 0 (all rows identical).
            w3blk = p_ref[o_w3:o_w3 + 8, :]                  # (8, HP)
            q8 = jax.lax.dot_general(
                w3blk, h, (((1,), (1,)), ((), ())),
                preferred_element_type=jnp.float32)          # (8, Bt)
            q = q8[0:1, :] + b3r[:, :1]                      # (1, Bt)
        else:
            # Gridless path: (Bt, 1) column.  out_dim = 1, so keep this off
            # the MXU: VPU multiply + XLU lane-reduce.
            w3r = p_ref[o_w3:o_w3 + 1, :]                    # (1, HP)
            q = jnp.sum(h * w3r, axis=-1, keepdims=True) + b3r[:, :1]
        o_ref[...] = q.astype(o_ref.dtype)

    return kernel


def qfunction_forward(latents, actions, packed_params, offsets,
                      latent_dim, action_dim, hidden_padded,
                      *, gridless_max_batch=8192, batch_tile=None,
                      use_bf16_matmul=False):
    """Pallas-backed QFunction forward. latents: (B, L), actions: (B, A)."""
    md = jnp.bfloat16 if use_bf16_matmul else jnp.float32
    latents = latents.astype(md)
    actions = actions.astype(md)
    B = latents.shape[0]
    R = packed_params.shape[0]

    if B <= gridless_max_batch:
        # Gridless path: one invocation, full arrays in VMEM (3 input DMAs).
        # Per-step grid overhead (~0.35-0.6 us) dominates this tiny MLP, so we
        # avoid the grid entirely up to batches where intermediates (~B*HP*4 B)
        # stay well under the scoped-VMEM default on every TPU generation.
        kernel = make_qfunction_kernel(latent_dim, action_dim, hidden_padded,
                                       offsets, lane_dense_out=False,
                                       matmul_dtype=md)
        vmem = pl.BlockSpec(memory_space=pltpu.MemorySpace.VMEM)
        return pl.pallas_call(
            kernel,
            out_shape=jax.ShapeDtypeStruct((B, 1), jnp.float32),
            in_specs=[vmem, vmem, vmem],
            out_specs=vmem,
        )(latents, actions, packed_params)

    # Grid path (very large batches): big batch tiles (>= 2048 unless the
    # caller overrides) so each step amortizes pipeline overhead; grid axis is
    # "parallel" so v7x's two TensorCores split the batch.  Weights use a
    # constant block index and stay VMEM-resident across grid steps.
    if batch_tile is None:
        batch_tile = max(2048, min(4096, _round_up(pl.cdiv(B, 2), 128)))
    assert batch_tile % 128 == 0, "batch_tile must be a multiple of 128"

    b_pad = _round_up(B, batch_tile)
    if b_pad != B:
        latents = jnp.pad(latents, ((0, b_pad - B), (0, 0)))
        actions = jnp.pad(actions, ((0, b_pad - B), (0, 0)))

    kernel = make_qfunction_kernel(latent_dim, action_dim, hidden_padded,
                                   offsets, lane_dense_out=True,
                                   matmul_dtype=md)
    q_row = pl.pallas_call(
        kernel,
        out_shape=jax.ShapeDtypeStruct((1, b_pad), jnp.float32),
        grid=(b_pad // batch_tile,),
        in_specs=[
            pl.BlockSpec((batch_tile, latent_dim), lambda i: (i, 0)),
            pl.BlockSpec((batch_tile, action_dim), lambda i: (i, 0)),
            pl.BlockSpec((R, hidden_padded), lambda i: (0, 0)),
        ],
        out_specs=pl.BlockSpec((1, batch_tile), lambda i: (0, i)),
        compiler_params=pltpu.CompilerParams(
            dimension_semantics=("parallel",)),
    )(latents, actions, packed_params)
    return q_row[0, :B].reshape(B, 1)


def init_params(key, mlp_dims):
    """Deterministic synthetic init. Weights stored as (in_dim, out_dim)."""
    params = []
    for (in_dim, out_dim) in mlp_dims:
        key, kw, kb = jax.random.split(key, 3)
        scale = 1.0 / jnp.sqrt(jnp.float32(in_dim))
        w = jax.random.uniform(kw, (in_dim, out_dim), jnp.float32, -scale, scale)
        b = jax.random.uniform(kb, (1, out_dim), jnp.float32, -scale, scale)
        params += [w, b]
    return params


def reference_forward(latents, actions, params):
    w1, b1, w2, b2, w3, b3 = params
    x = jnp.concatenate([latents, actions], axis=1)
    h = jax.nn.relu(x @ w1 + b1)
    h = jax.nn.relu(h @ w2 + b2)
    return h @ w3 + b3


if __name__ == "__main__":
    # Shapes consistent with the module's net_params['mlp'] after __init__ edits:
    #   [[latent_dim + action_dim, hidden], [hidden, hidden], [hidden, 1]]
    latent_dim = 32
    action_dim = 8
    hidden = 64
    mlp_dims = [(latent_dim + action_dim, hidden), (hidden, hidden), (hidden, 1)]

    key = jax.random.PRNGKey(0)
    key, k_lat, k_act, k_par = jax.random.split(key, 4)
    params = init_params(k_par, mlp_dims)
    packed, offsets, hidden_p = pack_params(params, latent_dim, action_dim, hidden)

    # --- 1) Small batch (inference-style): gridless path ---
    batch = 8
    latents = jax.random.normal(k_lat, (batch, latent_dim), jnp.float32)
    actions = jax.random.normal(k_act, (batch, action_dim), jnp.float32)

    q = qfunction_forward(latents, actions, packed, offsets,
                          latent_dim, action_dim, hidden_p)
    q = jax.block_until_ready(q)
    q_ref = reference_forward(latents, actions, params)
    assert q.shape == (batch, 1)
    assert jnp.allclose(q, q_ref, atol=1e-4, rtol=1e-4)

    # --- 2) Grid path forced at small shapes (lane-dense output, batch-parallel).
    # In production this path only triggers for B > gridless_max_batch; we force
    # it here to exercise it with small test data.
    key, k2l, k2a = jax.random.split(key, 3)
    b2 = 512
    lat2 = jax.random.normal(k2l, (b2, latent_dim), jnp.float32)
    act2 = jax.random.normal(k2a, (b2, action_dim), jnp.float32)
    q2 = qfunction_forward(lat2, act2, packed, offsets,
                           latent_dim, action_dim, hidden_p,
                           gridless_max_batch=0, batch_tile=256)
    q2 = jax.block_until_ready(q2)
    q2_ref = reference_forward(lat2, act2, params)
    assert q2.shape == (b2, 1)
    assert jnp.allclose(q2, q2_ref, atol=1e-4, rtol=1e-4)

    # --- 3) Grid path with ragged batch (zero-pad + slice, no gridless fallback).
    key, k3l, k3a = jax.random.split(key, 3)
    b3 = 300
    lat3 = jax.random.normal(k3l, (b3, latent_dim), jnp.float32)
    act3 = jax.random.normal(k3a, (b3, action_dim), jnp.float32)
    q3 = qfunction_forward(lat3, act3, packed, offsets,
                           latent_dim, action_dim, hidden_p,
                           gridless_max_batch=0, batch_tile=256)
    q3 = jax.block_until_ready(q3)
    q3_ref = reference_forward(lat3, act3, params)
    assert q3.shape == (b3, 1)
    assert jnp.allclose(q3, q3_ref, atol=1e-4, rtol=1e-4)

    # --- 4) bf16-MXU option (large-batch training path on v6e/v7x), loose tol.
    q4 = qfunction_forward(lat2, act2, packed, offsets,
                           latent_dim, action_dim, hidden_p,
                           gridless_max_batch=0, batch_tile=256,
                           use_bf16_matmul=True)
    q4 = jax.block_until_ready(q4)
    assert q4.shape == (b2, 1)
    assert jnp.allclose(q4, q2_ref, atol=1e-1, rtol=1e-1)

    # TODO(synk): twin-critic (Q1/Q2) fusion into one 128-lane-wide call is a
    # model-level change outside this single-QFunction module's semantics.

    print("KERNEL_OK")
</pallas_src>

<mosaic_0001>
module attributes {stable_mosaic.version = 11 : i64} {
  func.func @kernel(%arg0: memref<8x32xf32, #tpu.memory_space<vmem>>, %arg1: memref<8x8xf32, #tpu.memory_space<vmem>>, %arg2: memref<200x128xf32, #tpu.memory_space<vmem>>, %arg3: memref<8x1xf32, #tpu.memory_space<vmem>>) attributes {dimension_semantics = [], scalar_prefetch = 0 : i64, scratch_operands = 0 : i64, tpu.core_type = #tpu.core_type<tc>} {
    %c0 = arith.constant 0 : index
    %c0_0 = arith.constant 0 : index
    %0 = vector.load %arg0[%c0, %c0_0] : memref<8x32xf32, #tpu.memory_space<vmem>>, vector<8x32xf32>
    %c0_1 = arith.constant 0 : index
    %c0_2 = arith.constant 0 : index
    %1 = vector.load %arg1[%c0_1, %c0_2] : memref<8x8xf32, #tpu.memory_space<vmem>>, vector<8x8xf32>
    %c0_3 = arith.constant 0 : index
    %c0_4 = arith.constant 0 : index
    %2 = vector.load %arg2[%c0_3, %c0_4] : memref<200x128xf32, #tpu.memory_space<vmem>>, vector<32x128xf32>
    %c32 = arith.constant 32 : index
    %c0_5 = arith.constant 0 : index
    %3 = vector.load %arg2[%c32, %c0_5] : memref<200x128xf32, #tpu.memory_space<vmem>>, vector<8x128xf32>
    %c40 = arith.constant 40 : index
    %c0_6 = arith.constant 0 : index
    %4 = vector.load %arg2[%c40, %c0_6] : memref<200x128xf32, #tpu.memory_space<vmem>>, vector<1x128xf32>
    %c48 = arith.constant 48 : index
    %c0_7 = arith.constant 0 : index
    %5 = vector.load %arg2[%c48, %c0_7] : memref<200x128xf32, #tpu.memory_space<vmem>>, vector<128x128xf32>
    %c176 = arith.constant 176 : index
    %c0_8 = arith.constant 0 : index
    %6 = vector.load %arg2[%c176, %c0_8] : memref<200x128xf32, #tpu.memory_space<vmem>>, vector<1x128xf32>
    %c192 = arith.constant 192 : index
    %c0_9 = arith.constant 0 : index
    %7 = vector.load %arg2[%c192, %c0_9] : memref<200x128xf32, #tpu.memory_space<vmem>>, vector<1x128xf32>
    %cst = arith.constant dense<0.000000e+00> : vector<8x128xf32>
    %8 = tpu.matmul %0, %2, %cst {dimension_numbers = #tpu.dot_dimension_numbers<[1], [0], [0], [1], [0, 0, 1, 1], [], []>} : vector<8x32xf32>, vector<32x128xf32>, vector<8x128xf32> -> vector<8x128xf32>
    %cst_10 = arith.constant dense<0.000000e+00> : vector<8x128xf32>
    %9 = tpu.matmul %1, %3, %cst_10 {dimension_numbers = #tpu.dot_dimension_numbers<[1], [0], [0], [1], [0, 0, 1, 1], [], []>} : vector<8x8xf32>, vector<8x128xf32>, vector<8x128xf32> -> vector<8x128xf32>
    %10 = arith.addf %8, %9 : vector<8x128xf32>
    %11 = vector.broadcast %4 : vector<1x128xf32> to vector<8x128xf32>
    %12 = arith.addf %10, %11 : vector<8x128xf32>
    %cst_11 = arith.constant 0.000000e+00 : f32
    %13 = vector.broadcast %cst_11 : f32 to vector<8x128xf32>
    %14 = arith.maximumf %12, %13 : vector<8x128xf32>
    %cst_12 = arith.constant dense<0.000000e+00> : vector<8x128xf32>
    %15 = tpu.matmul %14, %5, %cst_12 {dimension_numbers = #tpu.dot_dimension_numbers<[1], [0], [0], [1], [0, 0, 1, 1], [], []>} : vector<8x128xf32>, vector<128x128xf32>, vector<8x128xf32> -> vector<8x128xf32>
    %16 = vector.broadcast %6 : vector<1x128xf32> to vector<8x128xf32>
    %17 = arith.addf %15, %16 : vector<8x128xf32>
    %cst_13 = arith.constant 0.000000e+00 : f32
    %18 = vector.broadcast %cst_13 : f32 to vector<8x128xf32>
    %19 = arith.maximumf %17, %18 : vector<8x128xf32>
    %c184 = arith.constant 184 : index
    %c0_14 = arith.constant 0 : index
    %20 = vector.load %arg2[%c184, %c0_14] : memref<200x128xf32, #tpu.memory_space<vmem>>, vector<1x128xf32>
    %21 = vector.broadcast %20 : vector<1x128xf32> to vector<8x128xf32>
    %22 = arith.mulf %19, %21 : vector<8x128xf32>
    %cst_15 = arith.constant dense<0.000000e+00> : vector<8xf32>
    %23 = vector.multi_reduction <add>, %22, %cst_15 [1] : vector<8x128xf32> to vector<8xf32>
    %24 = vector.shape_cast %23 : vector<8xf32> to vector<8x1xf32>
    %25 = vector.extract_strided_slice %7 {offsets = [0, 0], sizes = [1, 1], strides = [1, 1]} : vector<1x128xf32> to vector<1x1xf32>
    %26 = vector.broadcast %25 : vector<1x1xf32> to vector<8x1xf32>
    %27 = arith.addf %24, %26 : vector<8x1xf32>
    %c0_16 = arith.constant 0 : index
    %c0_17 = arith.constant 0 : index
    %28 = vector.load %arg3[%c0_16, %c0_17] : memref<8x1xf32, #tpu.memory_space<vmem>>, vector<8x1xf32>
    tpu.vector_store %arg3[%c0_16, %c0_17], %27 {strides = array<i32>} : memref<8x1xf32, #tpu.memory_space<vmem>>, vector<8x1xf32>,
    return
  }
}

</mosaic_0001>

<llo_original>
// kernel: tpu_custom_call.1
$region0: #{tpu_custom_call.1}
  #allocation0 [shape = 'u32[]', space=smem, size = 0x4, offset = 0x4, fixed_abs, tag = 'smem constant byte address 0x4 - core index']
  #allocation1 [shape = 'u32[144,128]{1,0:T(1,128)}', space=vmem, size = 0x12000, scoped, tag = 'internal scratch']
  %s0 = inlined_call_operand.hbm [shape: f32[8,32], index: 0, kind: input, shape index: {}]
  %s1 = inlined_call_operand.hbm [shape: f32[8,8], index: 1, kind: input, shape index: {}]
  %s2 = inlined_call_operand.hbm [shape: f32[200,128], index: 2, kind: input, shape index: {}]
  %s3 = inlined_call_operand.vmem [shape: f32[8,1], index: 3, kind: output, shape index: {}]
  %s4 = sld [smem:[#allocation0]]
  $region34: #{tpu_custom_call.1} parent=0
    _
  %s6 = ssub.s32 1, %s4
  %s7 = scalar_select 0, %s6, %s4
  $region1: #{tpu_custom_call.1} parent=0
    #allocation2 [shape = 'u8[4096]{0}', space=vmem, size = 0x1000, scoped, tag = 'input window, operand 0, single buffered']
    #allocation3 [shape = 's32[1]{0}', space=sflag, size = 0x4, scoped, tag = 'scoped memory for tpu_custom_call.1']
    #allocation4 [shape = 'u8[4096]{0}', space=vmem, size = 0x1000, scoped, tag = 'input window, operand 1, single buffered']
    #allocation5 [shape = 's32[1]{0}', space=sflag, size = 0x4, scoped, tag = 'scoped memory for tpu_custom_call.1']
    #allocation6 [shape = 'u8[102400]{0}', space=vmem, size = 0x19000, scoped, tag = 'input window, operand 2, single buffered']
    %8 = vsyncpa [#allocation3], 0
    %9 = vsyncpa [#allocation5], 0
    // Predicated region
    $region2: #{tpu_custom_call.1} parent=1 // pred_check
      _
    $region3: #{tpu_custom_call.1} parent=1 // pred_check_branch
      %11 = sbr.rel (0) target = $region5
    $region4: #{tpu_custom_call.1} parent=1 // pred_region
      %s13 = ssub.s32 128, 128
      %14 = vsyncadd [#allocation3], %s13
      %s16 = sshll.u32 [#allocation2], 4
      %s17 = int_to_ptr.vmem [resolvable:$true] %s16
      %19 = dma.hbm_to_vmem [thread:$0]  %s0, 128, %s17, [#allocation3]
    $region5: #{tpu_custom_call.1} parent=1 // pred_fallthru
      _
    // Predicated region
    $region6: #{tpu_custom_call.1} parent=1 // pred_check
      _
    $region7: #{tpu_custom_call.1} parent=1 // pred_check_branch
      %21 = sbr.rel (0) target = $region9
    $region8: #{tpu_custom_call.1} parent=1 // pred_region
      %s23 = ssub.s32 128, 128
      %24 = vsyncadd [#allocation5], %s23
      %s26 = sshll.u32 [#allocation4], 4
      %s27 = int_to_ptr.vmem [resolvable:$true] %s26
      %29 = dma.hbm_to_vmem [thread:$0]  %s1, 128, %s27, [#allocation5]
    $region9: #{tpu_custom_call.1} parent=1 // pred_fallthru
      _
    // Predicated region
    $region10: #{tpu_custom_call.1} parent=1 // pred_check
      _
    $region11: #{tpu_custom_call.1} parent=1 // pred_check_branch
      %31 = sbr.rel (0) target = $region13
    $region12: #{tpu_custom_call.1} parent=1 // pred_region
      %s33 = ssub.s32 3200, 3200
      %34 = vsyncadd [#allocation5], %s33
      %s35 = sshll.u32 [#allocation6], 4
      %s36 = int_to_ptr.vmem [resolvable:$true] %s35
      %41 = dma.hbm_to_vmem [thread:$0]  %s2, 3200, %s36, [#allocation5], 128, 128, 8
    $region13: #{tpu_custom_call.1} parent=1 // pred_fallthru
      _
    // Predicated region
    $region14: #{tpu_custom_call.1} parent=1 // pred_check
      _
    $region15: #{tpu_custom_call.1} parent=1 // pred_check_branch
      %43 = sbr.rel (0) target = $region17
    $region16: #{tpu_custom_call.1} parent=1 // pred_region
      %44 = dma.done [#allocation3], 128
    $region17: #{tpu_custom_call.1} parent=1 // pred_fallthru
      _
    // Predicated region
    $region18: #{tpu_custom_call.1} parent=1 // pred_check
      _
    $region19: #{tpu_custom_call.1} parent=1 // pred_check_branch
      %46 = sbr.rel (0) target = $region21
    $region20: #{tpu_custom_call.1} parent=1 // pred_region
      %47 = dma.done [#allocation5], 128
    $region21: #{tpu_custom_call.1} parent=1 // pred_fallthru
      _
    // Predicated region
    $region22: #{tpu_custom_call.1} parent=1 // pred_check
      _
    $region23: #{tpu_custom_call.1} parent=1 // pred_check_branch
      %49 = sbr.rel (0) target = $region25
    $region24: #{tpu_custom_call.1} parent=1 // pred_region
      %50 = dma.done [#allocation5], 3200
    $region25: #{tpu_custom_call.1} parent=1 // pred_fallthru
      _
    %v51 = vld [vmem:[#allocation2] sm:$0xff]
    %v52 = vld [vmem:[#allocation4] sm:$0xff]
    %v53 = vld [vmem:[#allocation6] sm:$0xff]
    %v54 = vld [vmem:[#allocation6 + $0x8] sm:$0xff]
    %v55 = vld [vmem:[#allocation6 + $0x10] sm:$0xff]
    %v56 = vld [vmem:[#allocation6 + $0x18] sm:$0xff]
    %v57 = vld [vmem:[#allocation6 + $0x20] sm:$0xff]
    %v58 = vld [vmem:[#allocation6 + $0x28] sm:$0x1]
    %v59 = vld [vmem:[#allocation6 + $0x30] sm:$0xff]
    %v60 = vld [vmem:[#allocation6 + $0x38] sm:$0xff]
    %v61 = vld [vmem:[#allocation6 + $0x40] sm:$0xff]
    %v62 = vld [vmem:[#allocation6 + $0x48] sm:$0xff]
    %v63 = vld [vmem:[#allocation6 + $0x50] sm:$0xff]
    %v64 = vld [vmem:[#allocation6 + $0x58] sm:$0xff]
    %v65 = vld [vmem:[#allocation6 + $0x60] sm:$0xff]
    %v66 = vld [vmem:[#allocation6 + $0x68] sm:$0xff]
    %v67 = vld [vmem:[#allocation6 + $0x70] sm:$0xff]
    %v68 = vld [vmem:[#allocation6 + $0x78] sm:$0xff]
    %v69 = vld [vmem:[#allocation6 + $0x80] sm:$0xff]
    %v70 = vld [vmem:[#allocation6 + $0x88] sm:$0xff]
    %v71 = vld [vmem:[#allocation6 + $0x90] sm:$0xff]
    %v72 = vld [vmem:[#allocation6 + $0x98] sm:$0xff]
    %v73 = vld [vmem:[#allocation6 + $0xa0] sm:$0xff]
    %v74 = vld [vmem:[#allocation6 + $0xa8] sm:$0xff]
    %v75 = vld [vmem:[#allocation6 + $0xb0] sm:$0x1]
    %v76 = vld [vmem:[#allocation6 + $0xc0] sm:$0x1]
    %vm77 = vcmask 64512
    %v79 = vsel %vm77, %v52, 0
    %81 = vmatprep.subr.mxu0 0.0
    %82 = vmatpush1.msra.mxu0 %v57
    %83 = vmatprep.subr.mxu0 0.0
    %84 = vmatpush1.msra.mxu0 0.0
    %85 = vmatprep.subr.mxu0 0.0
    %86 = vmatpush1.msra.mxu0 0.0
    %87 = vmatprep.subr.mxu0 0.0
    %88 = vmatpush1.msra.mxu0 0.0
    %89 = vmatprep.subr.mxu0 0.0
    %90 = vmatpush1.msra.mxu0 0.0
    %91 = vmatprep.subr.mxu0 0.0
    %92 = vmatpush1.msra.mxu0 0.0
    %93 = vmatprep.subr.mxu0 0.0
    %94 = vmatpush1.msra.mxu0 0.0
    %95 = vmatprep.subr.mxu0 0.0
    %96 = vmatpush1.msra.mxu0 0.0
    %97 = vmatprep.subr.mxu0 0.0
    %98 = vmatpush1.msra.mxu0 0.0
    %99 = vmatprep.subr.mxu0 0.0
    %100 = vmatpush1.msra.mxu0 0.0
    %101 = vmatprep.subr.mxu0 0.0
    %102 = vmatpush1.msra.mxu0 0.0
    %103 = vmatprep.subr.mxu0 0.0
    %104 = vmatpush1.msra.mxu0 0.0
    %105 = vmatprep.subr.mxu0 0.0
    %106 = vmatpush1.msra.mxu0 0.0
    %107 = vmatprep.subr.mxu0 0.0
    %108 = vmatpush1.msra.mxu0 0.0
    %109 = vmatprep.subr.mxu0 0.0
    %110 = vmatpush1.msra.mxu0 0.0
    %111 = vmatprep.subr.mxu0 0.0
    %112 = vmatpush1.msra.mxu0 0.0
    %113 = vmatprep.subr.mxu0 0.0
    %114 = vmatpush1.msra.mxu0 0.0
    %115 = vmatprep.subr.mxu0 0.0
    %116 = vmatpush1.msra.mxu0 0.0
    %117 = vmatprep.subr.mxu0 0.0
    %118 = vmatpush1.msra.mxu0 0.0
    %119 = vmatprep.subr.mxu0 0.0
    %120 = vmatpush1.msra.mxu0 0.0
    %121 = vmatprep.subr.mxu0 0.0
    %122 = vmatpush1.msra.mxu0 0.0
    %123 = vmatprep.subr.mxu0 0.0
    %124 = vmatpush1.msra.mxu0 0.0
    %125 = vmatprep.subr.mxu0 0.0
    %126 = vmatpush1.msra.mxu0 0.0
    %127 = vmatprep.subr.mxu0 0.0
    %128 = vmatpush1.msra.mxu0 0.0
    %129 = vmatprep.subr.mxu0 0.0
    %130 = vmatpush1.msra.mxu0 0.0
    %131 = vmatprep.subr.mxu0 0.0
    %132 = vmatpush1.msra.mxu0 0.0
    %133 = vmatprep.subr.mxu0 0.0
    %134 = vmatpush1.msra.mxu0 0.0
    %135 = vmatprep.subr.mxu0 0.0
    %136 = vmatpush1.msra.mxu0 0.0
    %137 = vmatprep.subr.mxu0 0.0
    %138 = vmatpush1.msra.mxu0 0.0
    %139 = vmatprep.subr.mxu0 0.0
    %140 = vmatpush1.msra.mxu0 0.0
    %141 = vmatprep.subr.mxu0 0.0
    %142 = vmatpush1.msra.mxu0 0.0
    %143 = vmatprep.subr.mxu0 0.0
    %144 = vmatpush1.msra.mxu0 0.0
    %145 = vmatprep.mubr.f32.mxu0 0.0
    %146 = vmatmul.mubr.f32.gmra.mrb[0].mxu0 %v79
    %v147 = vpop.f32.mrb[0].mxu0
    %v148 = vadd.f32 0.0, %v147
    %v149 = vpop.f32.mrb[0].mxu0
    %150 = vdwg.mxu0
    %vm151 = vcmask 261120
    %v153 = vsel %vm151, %v51, 0
    %155 = vmatprep.subr.mxu0 0.0
    %156 = vmatpush1.msra.mxu0 %v53
    %157 = vmatprep.subr.mxu0 0.0
    %158 = vmatpush1.msra.mxu0 %v54
    %159 = vmatprep.subr.mxu0 0.0
    %160 = vmatpush1.msra.mxu0 %v55
    %161 = vmatprep.subr.mxu0 0.0
    %162 = vmatpush1.msra.mxu0 %v56
    %163 = vmatprep.subr.mxu0 0.0
    %164 = vmatpush1.msra.mxu0 0.0
    %165 = vmatprep.subr.mxu0 0.0
    %166 = vmatpush1.msra.mxu0 0.0
    %167 = vmatprep.subr.mxu0 0.0
    %168 = vmatpush1.msra.mxu0 0.0
    %169 = vmatprep.subr.mxu0 0.0
    %170 = vmatpush1.msra.mxu0 0.0
    %171 = vmatprep.subr.mxu0 0.0
    %172 = vmatpush1.msra.mxu0 0.0
    %173 = vmatprep.subr.mxu0 0.0
    %174 = vmatpush1.msra.mxu0 0.0
    %175 = vmatprep.subr.mxu0 0.0
    %176 = vmatpush1.msra.mxu0 0.0
    %177 = vmatprep.subr.mxu0 0.0
    %178 = vmatpush1.msra.mxu0 0.0
    %179 = vmatprep.subr.mxu0 0.0
    %180 = vmatpush1.msra.mxu0 0.0
    %181 = vmatprep.subr.mxu0 0.0
    %182 = vmatpush1.msra.mxu0 0.0
    %183 = vmatprep.subr.mxu0 0.0
    %184 = vmatpush1.msra.mxu0 0.0
    %185 = vmatprep.subr.mxu0 0.0
    %186 = vmatpush1.msra.mxu0 0.0
    %187 = vmatprep.subr.mxu0 0.0
    %188 = vmatpush1.msra.mxu0 0.0
    %189 = vmatprep.subr.mxu0 0.0
    %190 = vmatpush1.msra.mxu0 0.0
    %191 = vmatprep.subr.mxu0 0.0
    %192 = vmatpush1.msra.mxu0 0.0
    %193 = vmatprep.subr.mxu0 0.0
    %194 = vmatpush1.msra.mxu0 0.0
    %195 = vmatprep.subr.mxu0 0.0
    %196 = vmatpush1.msra.mxu0 0.0
    %197 = vmatprep.subr.mxu0 0.0
    %198 = vmatpush1.msra.mxu0 0.0
    %199 = vmatprep.subr.mxu0 0.0
    %200 = vmatpush1.msra.mxu0 0.0
    %201 = vmatprep.subr.mxu0 0.0
    %202 = vmatpush1.msra.mxu0 0.0
    %203 = vmatprep.subr.mxu0 0.0
    %204 = vmatpush1.msra.mxu0 0.0
    %205 = vmatprep.subr.mxu0 0.0
    %206 = vmatpush1.msra.mxu0 0.0
    %207 = vmatprep.subr.mxu0 0.0
    %208 = vmatpush1.msra.mxu0 0.0
    %209 = vmatprep.subr.mxu0 0.0
    %210 = vmatpush1.msra.mxu0 0.0
    %211 = vmatprep.subr.mxu0 0.0
    %212 = vmatpush1.msra.mxu0 0.0
    %213 = vmatprep.subr.mxu0 0.0
    %214 = vmatpush1.msra.mxu0 0.0
    %215 = vmatprep.subr.mxu0 0.0
    %216 = vmatpush1.msra.mxu0 0.0
    %217 = vmatprep.subr.mxu0 0.0
    %218 = vmatpush1.msra.mxu0 0.0
    %219 = vmatprep.mubr.f32.mxu0 0.0
    %220 = vmatmul.mubr.f32.gmra.mrb[0].mxu0 %v153
    %v221 = vpop.f32.mrb[0].mxu0
    %v222 = vadd.f32 %v148, %v221
    %v223 = vpop.f32.mrb[0].mxu0
    %224 = vdwg.mxu0
    %v225 = vlaneseq
    %v226 = vshrl.u32 %v225, 7
    %v227 = vsub.s32 0, %v226
    %v228 = vrot.slane %v58, %v227
    %v229 = vadd.f32 %v222, %v228
    %v230 = vmax.f32 %v229, 0.0
    %v231 = vlaneseq
    %v232 = vshrl.u32 %v231, 7
    %v233 = vsub.s32 0, %v232
    %v234 = vrot.slane %v75, %v233
    %235 = vmatprep.subr.mxu0 0.0
    %236 = vmatpush1.msra.mxu0 %v59
    %237 = vmatprep.subr.mxu0 0.0
    %238 = vmatpush1.msra.mxu0 %v60
    %239 = vmatprep.subr.mxu0 0.0
    %240 = vmatpush1.msra.mxu0 %v61
    %241 = vmatprep.subr.mxu0 0.0
    %242 = vmatpush1.msra.mxu0 %v62
    %243 = vmatprep.subr.mxu0 0.0
    %244 = vmatpush1.msra.mxu0 %v63
    %245 = vmatprep.subr.mxu0 0.0
    %246 = vmatpush1.msra.mxu0 %v64
    %247 = vmatprep.subr.mxu0 0.0
    %248 = vmatpush1.msra.mxu0 %v65
    %249 = vmatprep.subr.mxu0 0.0
    %250 = vmatpush1.msra.mxu0 %v66
    %251 = vmatprep.subr.mxu0 0.0
    %252 = vmatpush1.msra.mxu0 %v67
    %253 = vmatprep.subr.mxu0 0.0
    %254 = vmatpush1.msra.mxu0 %v68
    %255 = vmatprep.subr.mxu0 0.0
    %256 = vmatpush1.msra.mxu0 %v69
    %257 = vmatprep.subr.mxu0 0.0
    %258 = vmatpush1.msra.mxu0 %v70
    %259 = vmatprep.subr.mxu0 0.0
    %260 = vmatpush1.msra.mxu0 %v71
    %261 = vmatprep.subr.mxu0 0.0
    %262 = vmatpush1.msra.mxu0 %v72
    %263 = vmatprep.subr.mxu0 0.0
    %264 = vmatpush1.msra.mxu0 %v73
    %265 = vmatprep.subr.mxu0 0.0
    %266 = vmatpush1.msra.mxu0 %v74
    %267 = vmatprep.subr.mxu0 0.0
    %268 = vmatpush1.msra.mxu0 0.0
    %269 = vmatprep.subr.mxu0 0.0
    %270 = vmatpush1.msra.mxu0 0.0
    %271 = vmatprep.subr.mxu0 0.0
    %272 = vmatpush1.msra.mxu0 0.0
    %273 = vmatprep.subr.mxu0 0.0
    %274 = vmatpush1.msra.mxu0 0.0
    %275 = vmatprep.subr.mxu0 0.0
    %276 = vmatpush1.msra.mxu0 0.0
    %277 = vmatprep.subr.mxu0 0.0
    %278 = vmatpush1.msra.mxu0 0.0
    %279 = vmatprep.subr.mxu0 0.0
    %280 = vmatpush1.msra.mxu0 0.0
    %281 = vmatprep.subr.mxu0 0.0
    %282 = vmatpush1.msra.mxu0 0.0
    %283 = vmatprep.subr.mxu0 0.0
    %284 = vmatpush1.msra.mxu0 0.0
    %285 = vmatprep.subr.mxu0 0.0
    %286 = vmatpush1.msra.mxu0 0.0
    %287 = vmatprep.subr.mxu0 0.0
    %288 = vmatpush1.msra.mxu0 0.0
    %289 = vmatprep.subr.mxu0 0.0
    %290 = vmatpush1.msra.mxu0 0.0
    %291 = vmatprep.subr.mxu0 0.0
    %292 = vmatpush1.msra.mxu0 0.0
    %293 = vmatprep.subr.mxu0 0.0
    %294 = vmatpush1.msra.mxu0 0.0
    %295 = vmatprep.subr.mxu0 0.0
    %296 = vmatpush1.msra.mxu0 0.0
    %297 = vmatprep.subr.mxu0 0.0
    %298 = vmatpush1.msra.mxu0 0.0
    %299 = vmatprep.mubr.f32.mxu0 0.0
    %300 = vmatmul.mubr.f32.gmra.mrb[0].mxu0 %v230
    %v301 = vpop.f32.mrb[0].mxu0
    %v302 = vadd.f32 %v234, %v301
    %v303 = vpop.f32.mrb[0].mxu0
    %304 = vdwg.mxu0
    %v305 = vmax.f32 %v302, 0.0
    %v306 = vld [vmem:[#allocation6 + $0xb8] sm:$0x1]
    %v307 = vlaneseq
    %v308 = vshrl.u32 %v307, 7
    %v309 = vsub.s32 0, %v308
    %v310 = vrot.slane %v306, %v309
    %v311 = vmul.f32 %v305, %v310
    %312 = vadd.xlane.f32.xlu0 %v311
    %v313 = vpop.xlane.xlu0 %312
    %v314 = vlaneseq
    %v315 = vshrl.u32 %v314, 7
    %v316 = vsub.s32 0, %v315
    %v317 = vrot.slane %v76, %v316
    %v318 = vadd.f32 %v313, %v317
    %vm319 = vcmask 7168
    %320 = vst.msk [vmem:[%s3] sm:$0xff] %vm319, %v318
    // Predicated region
    $region26: #{tpu_custom_call.1} parent=1 // pred_check
      _
    $region27: #{tpu_custom_call.1} parent=1 // pred_check_branch
      %322 = sbr.rel (0) target = $region29
    $region28: #{tpu_custom_call.1} parent=1 // pred_region
      _
    $region29: #{tpu_custom_call.1} parent=1 // pred_fallthru
      _
    // Predicated region
    $region30: #{tpu_custom_call.1} parent=1 // pred_check
      _
    $region31: #{tpu_custom_call.1} parent=1 // pred_check_branch
      %324 = sbr.rel (0) target = $region33
    $region32: #{tpu_custom_call.1} parent=1 // pred_region
      _
    $region33: #{tpu_custom_call.1} parent=1 // pred_fallthru
      _
    %325 = vsyncpa [#allocation3], 1
    %326 = vsyncpa [#allocation5], 1

</llo_original>
